<compile_context>
chip_gen: v5e
topology: v5e:2x2
jax: 0.10.0
libtpu: 0.0.40
codegen_flags: <defaults>
</compile_context>

<pallas_src>
import jax
import jax.numpy as jnp
from jax.experimental import pallas as pl
from jax.experimental.pallas import tpu as pltpu


def _grouped_expert_kernel(gid_ref, x_ref, we_ref, be_ref, out_ref):
    """One grid step = one (token-tile, Dout-tile) block of one expert.

    gid_ref : (n_tiles,) int32 scalar-prefetch (consumed by the index_maps only)
    x_ref   : (tm, D)    bf16  token tile (tokens already grouped by expert)
    we_ref  : (1, D, tn) bf16  this tile's expert weight column-block
    be_ref  : (1, 1, tn) f32   this tile's expert bias column-block
    out_ref : (tm, tn)         written exactly once (lane-dense)
    """
    del gid_ref
    acc = jnp.dot(x_ref[...], we_ref[0], preferred_element_type=jnp.float32)
    out_ref[...] = (acc + be_ref[0]).astype(out_ref.dtype)


def moe_forward(x, wg, bg, we, be, *, top_k: int, tm: int = 512, tn=None):
    """x: (B, S, D); wg: (D, E); bg: (1, E); we: (E, D, Dout); be: (E, Dout)."""
    B, S, D = x.shape
    E, D_w, Dout = we.shape
    assert D_w == D
    assert tm % 8 == 0
    T = B * S
    K = top_k

    # ---- Dout tile: lane-dense, keeps the streamed weight block (D, tn) VMEM-friendly --
    if tn is None:
        tn = Dout
        if Dout > 512:
            for c in (512, 256, 128):
                if Dout % c == 0:
                    tn = c
                    break
    assert Dout % tn == 0
    n_j = Dout // tn

    # ---- per-generation VMEM budget (review: ~96 MiB on v5e/v6e, ~48 MiB on v7x) -------
    try:
        vmem_cap = int(pltpu.get_tpu_info().vmem_capacity_bytes)
    except Exception:
        vmem_cap = 64 * 1024 * 1024
    vmem_limit = max(min(vmem_cap * 3 // 4, 100 * 1024 * 1024), 32 * 1024 * 1024)

    xf = x.reshape(T, D)

    # ---- routing prologue in plain JAX (tiny T*D*E matmul; f32 => reference routing) ---
    logits = jnp.dot(xf.astype(jnp.float32), wg.astype(jnp.float32),
                     precision=jax.lax.Precision.HIGHEST)
    logits = logits + bg.reshape(E).astype(jnp.float32)
    probs = jax.nn.softmax(logits, axis=-1)
    _, top_idx = jax.lax.top_k(probs, K)                       # (T, K) distinct experts

    # ---- sort (token, k) pairs by expert; pad every expert group to a multiple of tm ---
    exp_flat = top_idx.reshape(T * K).astype(jnp.int32)
    tok_flat = jnp.repeat(jnp.arange(T, dtype=jnp.int32), K)
    order = jnp.argsort(exp_flat, stable=True)
    exp_sorted = exp_flat[order]
    tok_sorted = tok_flat[order]

    counts = jnp.bincount(exp_flat, length=E).astype(jnp.int32)          # tokens / expert
    group_start = jnp.concatenate([jnp.zeros((1,), jnp.int32), jnp.cumsum(counts)[:-1]])
    padded = ((counts + tm - 1) // tm) * tm                              # tile-padded sizes
    padded_start = jnp.concatenate([jnp.zeros((1,), jnp.int32), jnp.cumsum(padded)[:-1]])
    padded_end = jnp.cumsum(padded)

    # static worst case on the tile count:  sum_e ceil(g_e/tm) <= ceil(T*K/tm) + E
    n_tiles = pl.cdiv(T * K, tm) + E
    P = n_tiles * tm

    rank = jnp.arange(T * K, dtype=jnp.int32) - group_start[exp_sorted]
    row = padded_start[exp_sorted] + rank                                # dst row in buffer

    x_buf = jnp.zeros((P, D), jnp.bfloat16).at[row].set(xf.astype(jnp.bfloat16)[tok_sorted])
    tok_buf = jnp.full((P,), T, jnp.int32).at[row].set(tok_sorted)       # row T == "drop"

    # per-tile expert id (scalar prefetch): expert whose padded span contains tile_start
    tile_start = jnp.arange(n_tiles, dtype=jnp.int32) * tm
    tile_expert = jnp.minimum(
        jnp.searchsorted(padded_end, tile_start, side="right").astype(jnp.int32), E - 1)

    we_b = we.astype(jnp.bfloat16)                      # (E, D, Dout)  bf16 (MXU-native)
    be_f = be.reshape(E, 1, Dout).astype(jnp.float32)   # (E, 1, Dout)

    out_buf = pl.pallas_call(
        _grouped_expert_kernel,
        out_shape=jax.ShapeDtypeStruct((P, Dout), x.dtype),
        grid_spec=pltpu.PrefetchScalarGridSpec(
            num_scalar_prefetch=1,                       # tile_expert -> SMEM
            grid=(n_tiles, n_j),
            in_specs=[
                pl.BlockSpec((tm, D), lambda i, j, gid: (i, 0)),             # token tile
                pl.BlockSpec((1, D, tn), lambda i, j, gid: (gid[i], 0, j)),  # expert W col-block
                pl.BlockSpec((1, 1, tn), lambda i, j, gid: (gid[i], 0, j)),  # expert b col-block
            ],
            out_specs=pl.BlockSpec((tm, tn), lambda i, j, gid: (i, j)),      # written once
        ),
        compiler_params=pltpu.CompilerParams(
            dimension_semantics=("parallel", "parallel"),
            vmem_limit_bytes=vmem_limit,
        ),
    )(tile_expert, x_buf, we_b, be_f)

    # ---- scatter-add grouped results back to token order (padding rows land on row T) --
    out = jnp.zeros((T + 1, Dout), out_buf.dtype).at[tok_buf].add(out_buf)[:T]
    return out.reshape(B, S, Dout).astype(x.dtype)


def moe_reference(x, wg, bg, we, be, *, top_k: int):
    """Pure-JAX mirror of the PyTorch forward (for a correctness check)."""
    logits = jnp.einsum("bsd,de->bse", x, wg,
                        precision=jax.lax.Precision.HIGHEST) + bg[0]
    probs = jax.nn.softmax(logits, axis=-1)
    _, top_idx = jax.lax.top_k(probs, top_k)                          # (B,S,K)
    out = jnp.zeros_like(x)                                           # torch: zeros_like(x)
    for e in range(we.shape[0]):
        eo = jnp.einsum("bsd,dk->bsk", x, we[e],
                        precision=jax.lax.Precision.HIGHEST) + be[e]
        m = (top_idx == e).astype(x.dtype).sum(axis=-1, keepdims=True)
        out = out + m * eo
    return out


if __name__ == "__main__":
    # small shapes consistent with the module: (batch, seq, embed)
    B, S, D = 2, 8, 32
    NUM_EXPERTS, TOP_K = 8, 2
    # the torch module only works when output_size == input_size (output = zeros_like(x))
    D_OUT = D

    key = jax.random.PRNGKey(0)
    kx, kwg, kbg, kwe, kbe = jax.random.split(key, 5)
    x = jax.random.normal(kx, (B, S, D), jnp.float32)
    wg = jax.random.normal(kwg, (D, NUM_EXPERTS), jnp.float32) * 0.2
    bg = jax.random.normal(kbg, (1, NUM_EXPERTS), jnp.float32) * 0.1
    we = jax.random.normal(kwe, (NUM_EXPERTS, D, D_OUT), jnp.float32) * (1.0 / jnp.sqrt(D))
    be = jax.random.normal(kbe, (NUM_EXPERTS, D_OUT), jnp.float32) * 0.1

    out = jax.block_until_ready(moe_forward(x, wg, bg, we, be, top_k=TOP_K))
    ref = moe_reference(x, wg, bg, we, be, top_k=TOP_K)

    max_err = float(jnp.max(jnp.abs(out - ref)))
    assert out.shape == (B, S, D_OUT), out.shape
    # bf16 expert matmuls vs f32 reference -> small elementwise error; routing is f32.
    assert max_err < 5e-2, f"mismatch vs reference: max abs err {max_err}"
    print("KERNEL_OK")
</pallas_src>

<mosaic_0001>
module attributes {stable_mosaic.version = 11 : i64} {
  func.func @_grouped_expert_kernel(%arg0: i32, %arg1: i32, %arg2: memref<9xi32, #tpu.memory_space<smem>>, %arg3: memref<512x32xbf16, #tpu.memory_space<vmem>>, %arg4: memref<1x32x32xbf16, #tpu.memory_space<vmem>>, %arg5: memref<1x1x32xf32, #tpu.memory_space<vmem>>, %arg6: memref<512x32xf32, #tpu.memory_space<vmem>>) attributes {dimension_semantics = [#tpu.dimension_semantics<parallel>, #tpu.dimension_semantics<parallel>], iteration_bounds = array<i64: 9, 1>, scalar_prefetch = 1 : i64, scratch_operands = 0 : i64, tpu.core_type = #tpu.core_type<tc>, window_params = [{transform_indices = @transform_0, window_bounds = array<i64: 512, 32>}, {transform_indices = @transform_1, window_bounds = array<i64: 1, 32, 32>}, {transform_indices = @transform_2, window_bounds = array<i64: 1, 1, 32>}, {transform_indices = @transform_3, window_bounds = array<i64: 512, 32>}]} {
    %c0 = arith.constant 0 : index
    %c0_0 = arith.constant 0 : index
    %0 = vector.load %arg3[%c0, %c0_0] : memref<512x32xbf16, #tpu.memory_space<vmem>>, vector<512x32xbf16>
    %c0_1 = arith.constant 0 : index
    %c0_2 = arith.constant 0 : index
    %c0_3 = arith.constant 0 : index
    %1 = vector.load %arg4[%c0_1, %c0_2, %c0_3] : memref<1x32x32xbf16, #tpu.memory_space<vmem>>, vector<1x32x32xbf16>
    %2 = vector.shape_cast %1 : vector<1x32x32xbf16> to vector<32x32xbf16>
    %cst = arith.constant dense<0.000000e+00> : vector<512x32xf32>
    %3 = tpu.matmul %0, %2, %cst {dimension_numbers = #tpu.dot_dimension_numbers<[1], [0], [0], [1], [0, 0, 1, 1], [], []>} : vector<512x32xbf16>, vector<32x32xbf16>, vector<512x32xf32> -> vector<512x32xf32>
    %c0_4 = arith.constant 0 : index
    %c0_5 = arith.constant 0 : index
    %c0_6 = arith.constant 0 : index
    %4 = vector.load %arg5[%c0_4, %c0_5, %c0_6] : memref<1x1x32xf32, #tpu.memory_space<vmem>>, vector<1x1x32xf32>
    %5 = vector.shape_cast %4 : vector<1x1x32xf32> to vector<1x32xf32>
    %6 = vector.broadcast %5 : vector<1x32xf32> to vector<512x32xf32>
    %7 = arith.addf %3, %6 : vector<512x32xf32>
    %c0_7 = arith.constant 0 : index
    %c0_8 = arith.constant 0 : index
    %8 = vector.load %arg6[%c0_7, %c0_8] : memref<512x32xf32, #tpu.memory_space<vmem>>, vector<512x32xf32>
    tpu.vector_store %arg6[%c0_7, %c0_8], %7 {strides = array<i32>} : memref<512x32xf32, #tpu.memory_space<vmem>>, vector<512x32xf32>,
    return
  }
  func.func @transform_0(%arg0: i32, %arg1: i32, %arg2: memref<9xi32, #tpu.memory_space<smem>>) -> (i32, i32) {
    %c0_i32 = arith.constant 0 : i32
    %c0_i32_0 = arith.constant 0 : i32
    return %arg0, %c0_i32 : i32, i32
  }
  func.func @transform_1(%arg0: i32, %arg1: i32, %arg2: memref<9xi32, #tpu.memory_space<smem>>) -> (i32, i32, i32) {
    %0 = arith.index_cast %arg0 : i32 to index
    %1 = memref.load %arg2[%0] : memref<9xi32, #tpu.memory_space<smem>>
    %c0_i32 = arith.constant 0 : i32
    %c0_i32_0 = arith.constant 0 : i32
    return %1, %c0_i32, %arg1 : i32, i32, i32
  }
  func.func @transform_2(%arg0: i32, %arg1: i32, %arg2: memref<9xi32, #tpu.memory_space<smem>>) -> (i32, i32, i32) {
    %0 = arith.index_cast %arg0 : i32 to index
    %1 = memref.load %arg2[%0] : memref<9xi32, #tpu.memory_space<smem>>
    %c0_i32 = arith.constant 0 : i32
    %c0_i32_0 = arith.constant 0 : i32
    return %1, %c0_i32, %arg1 : i32, i32, i32
  }
  func.func @transform_3(%arg0: i32, %arg1: i32, %arg2: memref<9xi32, #tpu.memory_space<smem>>) -> (i32, i32) {
    %c0_i32 = arith.constant 0 : i32
    return %arg0, %arg1 : i32, i32
  }
}

</mosaic_0001>

<llo_original>
// kernel: tpu_custom_call.1
$region0: #{tpu_custom_call.1}
  #allocation0 [shape = 'u32[]', space=smem, size = 0x4, offset = 0x4, fixed_abs, tag = 'smem constant byte address 0x4 - core index']
  #allocation1 [shape = 'u32[72,128]{1,0:T(1,128)}', space=vmem, size = 0x9000, scoped, tag = 'internal scratch']
  #allocation2 [shape = 's32[1]{0}', space=sflag, size = 0x4, scoped, tag = 'scoped memory for tpu_custom_call.1']
  #allocation3 [shape = 'u8[512]{0}', space=smem, size = 0x200, scoped, tag = 'prefetched SMEM operand 0']
  %s0 = inlined_call_operand.hbm [shape: s32[9], index: 0, kind: input, shape index: {}]
  %s1 = inlined_call_operand.vmem [shape: bf16[4608,32], index: 1, kind: input, shape index: {}]
  %s2 = inlined_call_operand.hbm [shape: bf16[8,32,32], index: 2, kind: input, shape index: {}]
  %s3 = inlined_call_operand.hbm [shape: f32[8,1,32], index: 3, kind: input, shape index: {}]
  %s4 = inlined_call_operand.vmem [shape: f32[4608,32], index: 4, kind: output, shape index: {}]
  %s5 = sld [smem:[#allocation0]]
  $region53: #{tpu_custom_call.1} parent=0
    _
  %s7 = ssub.s32 1, %s5
  %s8 = scalar_select 0, %s7, %s5
  %s10 = sshll.u32 %s0, 4
  %s11 = int_to_ptr.hbm [resolvable:$true] %s10
  %13 = dma.hbm_to_smem %s11, 16, [#allocation3], [#allocation2]
  %15 = dma.done [#allocation2], 16
  %16 = sfence
  $region1: #{tpu_custom_call.1} parent=0
    #allocation4 [shape = 'u8[16384]{0}', space=vmem, size = 0x4000, scoped, tag = 'input window, operand 2']
    #allocation5 [shape = 's32[2]{0}', space=sflag, size = 0x8, scoped, tag = 'scoped memory for tpu_custom_call.1']
    #allocation6 [shape = 'u8[1024]{0}', space=vmem, size = 0x400, scoped, tag = 'input window, operand 3']
    #allocation7 [shape = 's32[2]{0}', space=sflag, size = 0x8, scoped, tag = 'scoped memory for tpu_custom_call.1']
    %17 = vsyncpa [#allocation5], 0
    %s18 = scalar_lea.sflag [#allocation5], 1
    %19 = vsyncpa %s18, 0
    %20 = vsyncpa [#allocation7], 0
    %s21 = scalar_lea.sflag [#allocation7], 1
    %22 = vsyncpa %s21, 0
    loop: start=0, step=1, limit=11
    $region2: #{tpu_custom_call.1} parent=1 // loop_pre_header
      _
    $region3: #{tpu_custom_call.1} parent=1 // loop_header
      %s24 = sphi 0, %s28
      %p25 = scmp.ge.s32.totalorder %s24, 11
      %s31 = sphi 0, %s43
      %s32 = sphi 0, %s39
      %s33 = sphi 0, %s31
      %s34 = sphi 0, %s32
      %s35 = sphi 0, %s33
      %s36 = sphi 0, %s34
      %s46 = sphi 0, %s48
      %s49 = sphi 0, %s46
      %s50 = sphi 0, %s49
      %s66 = sphi 0, %s50
      %s76 = sphi 0, %s78
      %s79 = sphi 0, %s76
      %s80 = sphi 0, %s79
      %s96 = sphi 0, %s80
      %s106 = sphi 0, %s108
      %s109 = sphi 0, %s106
      %s110 = sphi 0, %s109
      %s126 = sphi 0, %s110
      %s134 = sphi 0, %s136
      %s137 = sphi 0, %s134
      %s138 = sphi 0, %s137
      %s154 = sphi 0, %s138
    $region4: #{tpu_custom_call.1} parent=1 // loop_header_branch
      %27 = sbr.rel (%p25) target = $region8
    $region5: #{tpu_custom_call.1} parent=1 // loop_body
      %s29 = ssub.s32 %s24, 1
      %s30 = ssub.s32 %s24, 2
      %s37 = sadd.s32 1, %s32
      %p38 = scmp.ge.s32.totalorder %s37, 1
      %s39 = scalar_select %p38, 0, %s37
      %s40 = sadd.s32 1, %s31
      %s41 = scalar_select %p38, %s40, %s31
      %p42 = scmp.ge.s32.totalorder %s41, 9
      %s43 = scalar_select %p42, 0, %s41
      %s44 = ssub.s32 %s31, %s43
      %p45 = scmp.eq.s32.totalorder %s44, 0
      %s47 = sadd.s32 %s46, 1
      %s48 = scalar_select %p45, %s46, %s47
      %p51 = pneg %p45
      %p52 = scmp.eq.s32.totalorder %s24, 8
      %p53 = por %p51, %p52
      %p54 = scmp.ne.s32.totalorder %s46, %s49
      %p55 = scmp.eq.s32.totalorder %s24, 0
      %p56 = por %p54, %p55
      %p57 = scmp.ne.s32.totalorder %s46, %s49
      %p58 = scmp.eq.s32.totalorder %s29, 8
      %p59 = por %p57, %p58
      %p60 = scmp.ne.s32.totalorder %s49, %s50
      %p61 = scmp.eq.s32.totalorder %s29, 0
      %p62 = por %p60, %p61
      %p63 = scmp.ne.s32.totalorder %s49, %s50
      %p64 = scmp.eq.s32.totalorder %s30, 8
      %p65 = por %p63, %p64
      %p67 = scmp.ne.s32.totalorder %s50, %s66
      %p68 = scmp.eq.s32.totalorder %s30, 0
      %p69 = por %p67, %p68
      %s70 = sld [smem:[#allocation3 + %s31]]
      %s71 = sld [smem:[#allocation3 + %s43]]
      %s72 = ssub.s32 %s70, %s71
      %s73 = ssub.s32 %s32, %s39
      %s74 = sor.u32 %s72, %s73
      %p75 = scmp.eq.s32.totalorder %s74, 0
      %s77 = sadd.s32 %s76, 1
      %s78 = scalar_select %p75, %s76, %s77
      %p81 = pneg %p75
      %p82 = scmp.eq.s32.totalorder %s24, 8
      %p83 = por %p81, %p82
      %p84 = scmp.ne.s32.totalorder %s76, %s79
      %p85 = scmp.eq.s32.totalorder %s24, 0
      %p86 = por %p84, %p85
      %p87 = scmp.ne.s32.totalorder %s76, %s79
      %p88 = scmp.eq.s32.totalorder %s29, 8
      %p89 = por %p87, %p88
      %p90 = scmp.ne.s32.totalorder %s79, %s80
      %p91 = scmp.eq.s32.totalorder %s29, 0
      %p92 = por %p90, %p91
      %p93 = scmp.ne.s32.totalorder %s79, %s80
      %p94 = scmp.eq.s32.totalorder %s30, 8
      %p95 = por %p93, %p94
      %p97 = scmp.ne.s32.totalorder %s80, %s96
      %p98 = scmp.eq.s32.totalorder %s30, 0
      %p99 = por %p97, %p98
      %s100 = sld [smem:[#allocation3 + %s31]]
      %s101 = sld [smem:[#allocation3 + %s43]]
      %s102 = ssub.s32 %s100, %s101
      %s103 = ssub.s32 %s32, %s39
      %s104 = sor.u32 %s102, %s103
      %p105 = scmp.eq.s32.totalorder %s104, 0
      %s107 = sadd.s32 %s106, 1
      %s108 = scalar_select %p105, %s106, %s107
      %p111 = pneg %p105
      %p112 = scmp.eq.s32.totalorder %s24, 8
      %p113 = por %p111, %p112
      %p114 = scmp.ne.s32.totalorder %s106, %s109
      %p115 = scmp.eq.s32.totalorder %s24, 0
      %p116 = por %p114, %p115
      %p117 = scmp.ne.s32.totalorder %s106, %s109
      %p118 = scmp.eq.s32.totalorder %s29, 8
      %p119 = por %p117, %p118
      %p120 = scmp.ne.s32.totalorder %s109, %s110
      %p121 = scmp.eq.s32.totalorder %s29, 0
      %p122 = por %p120, %p121
      %p123 = scmp.ne.s32.totalorder %s109, %s110
      %p124 = scmp.eq.s32.totalorder %s30, 8
      %p125 = por %p123, %p124
      %p127 = scmp.ne.s32.totalorder %s110, %s126
      %p128 = scmp.eq.s32.totalorder %s30, 0
      %p129 = por %p127, %p128
      %s130 = ssub.s32 %s31, %s43
      %s131 = ssub.s32 %s32, %s39
      %s132 = sor.u32 %s130, %s131
      %p133 = scmp.eq.s32.totalorder %s132, 0
      %s135 = sadd.s32 %s134, 1
      %s136 = scalar_select %p133, %s134, %s135
      %p139 = pneg %p133
      %p140 = scmp.eq.s32.totalorder %s24, 8
      %p141 = por %p139, %p140
      %p142 = scmp.ne.s32.totalorder %s134, %s137
      %p143 = scmp.eq.s32.totalorder %s24, 0
      %p144 = por %p142, %p143
      %p145 = scmp.ne.s32.totalorder %s134, %s137
      %p146 = scmp.eq.s32.totalorder %s29, 8
      %p147 = por %p145, %p146
      %p148 = scmp.ne.s32.totalorder %s137, %s138
      %p149 = scmp.eq.s32.totalorder %s29, 0
      %p150 = por %p148, %p149
      %p151 = scmp.ne.s32.totalorder %s137, %s138
      %p152 = scmp.eq.s32.totalorder %s30, 8
      %p153 = por %p151, %p152
      %p155 = scmp.ne.s32.totalorder %s138, %s154
      %p156 = scmp.eq.s32.totalorder %s30, 0
      %p157 = por %p155, %p156
      %p158 = scmp.le.s32.totalorder 1, %s24
      %p159 = scmp.lt.s32.totalorder %s24, 10
      %p160 = pnand %p158, %p159
      %p161 = pneg %p160
      // Predicated region
      $region9: #{tpu_custom_call.1} parent=5 // pred_check
        _
      $region10: #{tpu_custom_call.1} parent=5 // pred_check_branch
        %163 = sbr.rel (%p160) target = $region12
      $region11: #{tpu_custom_call.1} parent=5 // pred_region
        %s164 = ssub.s32 %s24, 1
      $region12: #{tpu_custom_call.1} parent=5 // pred_fallthru
        _
      %p165 = scmp.lt.s32.totalorder %s24, 9
      // Predicated region
      $region13: #{tpu_custom_call.1} parent=5 // pred_check
        %p166 = pneg %p165
      $region14: #{tpu_custom_call.1} parent=5 // pred_check_branch
        %168 = sbr.rel (%p166) target = $region16
      $region15: #{tpu_custom_call.1} parent=5 // pred_region
        // Predicated region
        $region17: #{tpu_custom_call.1} parent=15 // pred_check
          %p169 = pneg %p56
        $region18: #{tpu_custom_call.1} parent=15 // pred_check_branch
          %171 = sbr.rel (%p169) target = $region20
        $region19: #{tpu_custom_call.1} parent=15 // pred_region
          %s172 = smul.u32 64, %s31
          %p173 = scmp.lt.s32.totalorder %s172, 575
          %s174 = scalar_select %p173, %s172, 575
          %s175 = smul.addr %s174, 4
          %s176 = scalar_lea.vmem %s1, %s175
          %s177 = smul.u32 64, %s31
        $region20: #{tpu_custom_call.1} parent=15 // pred_fallthru
          _
        // Predicated region
        $region21: #{tpu_custom_call.1} parent=15 // pred_check
          %p178 = pneg %p86
        $region22: #{tpu_custom_call.1} parent=15 // pred_check_branch
          %180 = sbr.rel (%p178) target = $region24
        $region23: #{tpu_custom_call.1} parent=15 // pred_region
          %s181 = sand.u32 %s76, 1
          %s182 = scalar_lea.sflag [#allocation5], %s181
          %s183 = sand.u32 %s76, 1
          %s184 = smul.addr %s183, 16
          %s185 = scalar_lea.vmem [#allocation4], %s184
          %s186 = sld [smem:[#allocation3 + %s31]]
          %188 = vsyncadd %s182, 0
          %s189 = smul.addr %s186, 4
          %s190 = sadd.s32 %s32, %s189
          %s191 = smul.addr %s190, 4
          %s192 = scalar_lea.hbm %s2, %s191
          %s193 = sshll.u32 %s192, 4
          %s194 = int_to_ptr.hbm [resolvable:$true] %s193
          %s195 = sshll.u32 %s185, 4
          %s196 = int_to_ptr.vmem [resolvable:$true] %s195
          %201 = dma.hbm_to_vmem [thread:$0]  %s194, 256, %s196, %s182, 64, 64, 4
        $region24: #{tpu_custom_call.1} parent=15 // pred_fallthru
          _
        // Predicated region
        $region25: #{tpu_custom_call.1} parent=15 // pred_check
          %p202 = pneg %p116
        $region26: #{tpu_custom_call.1} parent=15 // pred_check_branch
          %204 = sbr.rel (%p202) target = $region28
        $region27: #{tpu_custom_call.1} parent=15 // pred_region
          %s205 = sand.u32 %s106, 1
          %s206 = scalar_lea.sflag [#allocation7], %s205
          %s207 = sand.u32 %s106, 1
          %s208 = scalar_lea.vmem [#allocation6], %s207
          %s209 = sld [smem:[#allocation3 + %s31]]
          %211 = vsyncadd %s206, 0
          %s212 = sadd.s32 %s32, %s209
          %s213 = scalar_lea.hbm %s3, %s212
          %s215 = sshll.u32 %s213, 4
          %s216 = int_to_ptr.hbm [resolvable:$true] %s215
          %s217 = sshll.u32 %s208, 4
          %s218 = int_to_ptr.vmem [resolvable:$true] %s217
          %220 = dma.hbm_to_vmem [thread:$0]  %s216, 16, %s218, %s206
        $region28: #{tpu_custom_call.1} parent=15 // pred_fallthru
          _
      $region16: #{tpu_custom_call.1} parent=5 // pred_fallthru
        _
      %p221 = scmp.le.s32.totalorder 1, %s24
      %p222 = scmp.lt.s32.totalorder %s24, 10
      %p223 = pnand %p221, %p222
      %p224 = pneg %p223
      // Predicated region
      $region29: #{tpu_custom_call.1} parent=5 // pred_check
        _
      $region30: #{tpu_custom_call.1} parent=5 // pred_check_branch
        %226 = sbr.rel (%p223) target = $region32
      $region31: #{tpu_custom_call.1} parent=5 // pred_region
        %s227 = ssub.s32 %s24, 1
        %s228 = sand.u32 %s79, 1
        %s229 = scalar_lea.sflag [#allocation5], %s228
        %s230 = sand.u32 %s79, 1
        %s231 = smul.addr %s230, 16
        %s232 = scalar_lea.vmem [#allocation4], %s231
        // Predicated region
        $region33: #{tpu_custom_call.1} parent=31 // pred_check
          %p233 = pneg %p92
        $region34: #{tpu_custom_call.1} parent=31 // pred_check_branch
          %235 = sbr.rel (%p233) target = $region36
        $region35: #{tpu_custom_call.1} parent=31 // pred_region
          %237 = dma.done %s229, 256
        $region36: #{tpu_custom_call.1} parent=31 // pred_fallthru
          _
        %s238 = sand.u32 %s109, 1
        %s239 = scalar_lea.sflag [#allocation7], %s238
        %s240 = sand.u32 %s109, 1
        %s241 = scalar_lea.vmem [#allocation6], %s240
        // Predicated region
        $region37: #{tpu_custom_call.1} parent=31 // pred_check
          %p242 = pneg %p122
        $region38: #{tpu_custom_call.1} parent=31 // pred_check_branch
          %244 = sbr.rel (%p242) target = $region40
        $region39: #{tpu_custom_call.1} parent=31 // pred_region
          %246 = dma.done %s239, 16
        $region40: #{tpu_custom_call.1} parent=31 // pred_fallthru
          _
        %s247 = smul.u32 64, %s33
        %p248 = scmp.lt.s32.totalorder %s247, 575
        %s249 = scalar_select %p248, %s247, 575
        %s250 = smul.addr %s249, 4
        %s251 = scalar_lea.vmem %s1, %s250
        %p252 = pneg %p62
        %p253 = pneg %p59
        %s254 = sand.u32 %s79, 1
        %s255 = scalar_lea.sflag [#allocation5], %s254
        %s256 = sand.u32 %s79, 1
        %s257 = smul.addr %s256, 16
        %s258 = scalar_lea.vmem [#allocation4], %s257
        %p259 = pneg %p92
        %p260 = pneg %p89
        %s261 = sand.u32 %s109, 1
        %s262 = scalar_lea.sflag [#allocation7], %s261
        %s263 = sand.u32 %s109, 1
        %s264 = scalar_lea.vmem [#allocation6], %s263
        %p265 = pneg %p122
        %p266 = pneg %p119
        %p267 = pneg %p150
        %p268 = pneg %p147
        %s269 = smul.u32 64, %s33
        %p270 = scmp.lt.s32.totalorder %s269, 575
        %s271 = scalar_select %p270, %s269, 575
        %p272 = scmp.lt.s32.totalorder %s34, 0
        %s273 = scalar_select %p272, %s34, 0
        %s274 = sadd.s32 %s273, %s271
        %s275 = smul.addr %s274, 8
        %s276 = scalar_lea.vmem %s4, %s275
        %s277 = smul.u32 64, %s33
        %p278 = scmp.lt.s32.totalorder %s277, 575
        %s279 = scalar_select %p278, %s277, 575
        %s280 = smul.addr %s279, 4
        %s281 = scalar_lea.vmem %s1, %s280
        %s282 = smul.u32 64, %s33
        %s283 = sld [smem:[#allocation3 + %s33]]
        %s284 = sld [smem:[#allocation3 + %s33]]
        %s285 = smul.u32 64, %s33
        %p286 = scmp.lt.s32.totalorder %s285, 575
        %s287 = scalar_select %p286, %s285, 575
        %p288 = scmp.lt.s32.totalorder %s34, 0
        %s289 = scalar_select %p288, %s34, 0
        %s290 = sadd.s32 %s289, %s287
        %s291 = smul.addr %s290, 8
        %s292 = scalar_lea.vmem %s4, %s291
        %s293 = smul.u32 64, %s33
        %v295 = vld [vmem:[%s281] sm:$0xf]
        %v296 = vld [vmem:[%s281 + $0x4] sm:$0xf]
        %v297 = vld [vmem:[%s281 + $0x8] sm:$0xf]
        %v298 = vld [vmem:[%s281 + $0xc] sm:$0xf]
        %v299 = vld [vmem:[%s281 + $0x10] sm:$0xf]
        %v300 = vld [vmem:[%s281 + $0x14] sm:$0xf]
        %v301 = vld [vmem:[%s281 + $0x18] sm:$0xf]
        %v302 = vld [vmem:[%s281 + $0x1c] sm:$0xf]
        %v303 = vld [vmem:[%s281 + $0x20] sm:$0xf]
        %v304 = vld [vmem:[%s281 + $0x24] sm:$0xf]
        %v305 = vld [vmem:[%s281 + $0x28] sm:$0xf]
        %v306 = vld [vmem:[%s281 + $0x2c] sm:$0xf]
        %v307 = vld [vmem:[%s281 + $0x30] sm:$0xf]
        %v308 = vld [vmem:[%s281 + $0x34] sm:$0xf]
        %v309 = vld [vmem:[%s281 + $0x38] sm:$0xf]
        %v310 = vld [vmem:[%s281 + $0x3c] sm:$0xf]
        %v311 = vld [vmem:[%s281 + $0x40] sm:$0xf]
        %v312 = vld [vmem:[%s281 + $0x44] sm:$0xf]
        %v313 = vld [vmem:[%s281 + $0x48] sm:$0xf]
        %v314 = vld [vmem:[%s281 + $0x4c] sm:$0xf]
        %v315 = vld [vmem:[%s281 + $0x50] sm:$0xf]
        %v316 = vld [vmem:[%s281 + $0x54] sm:$0xf]
        %v317 = vld [vmem:[%s281 + $0x58] sm:$0xf]
        %v318 = vld [vmem:[%s281 + $0x5c] sm:$0xf]
        %v319 = vld [vmem:[%s281 + $0x60] sm:$0xf]
        %v320 = vld [vmem:[%s281 + $0x64] sm:$0xf]
        %v321 = vld [vmem:[%s281 + $0x68] sm:$0xf]
        %v322 = vld [vmem:[%s281 + $0x6c] sm:$0xf]
        %v323 = vld [vmem:[%s281 + $0x70] sm:$0xf]
        %v324 = vld [vmem:[%s281 + $0x74] sm:$0xf]
        %v325 = vld [vmem:[%s281 + $0x78] sm:$0xf]
        %v326 = vld [vmem:[%s281 + $0x7c] sm:$0xf]
        %v327 = vld [vmem:[%s281 + $0x80] sm:$0xf]
        %v328 = vld [vmem:[%s281 + $0x84] sm:$0xf]
        %v329 = vld [vmem:[%s281 + $0x88] sm:$0xf]
        %v330 = vld [vmem:[%s281 + $0x8c] sm:$0xf]
        %v331 = vld [vmem:[%s281 + $0x90] sm:$0xf]
        %v332 = vld [vmem:[%s281 + $0x94] sm:$0xf]
        %v333 = vld [vmem:[%s281 + $0x98] sm:$0xf]
        %v334 = vld [vmem:[%s281 + $0x9c] sm:$0xf]
        %v335 = vld [vmem:[%s281 + $0xa0] sm:$0xf]
        %v336 = vld [vmem:[%s281 + $0xa4] sm:$0xf]
        %v337 = vld [vmem:[%s281 + $0xa8] sm:$0xf]
        %v338 = vld [vmem:[%s281 + $0xac] sm:$0xf]
        %v339 = vld [vmem:[%s281 + $0xb0] sm:$0xf]
        %v340 = vld [vmem:[%s281 + $0xb4] sm:$0xf]
        %v341 = vld [vmem:[%s281 + $0xb8] sm:$0xf]
        %v342 = vld [vmem:[%s281 + $0xbc] sm:$0xf]
        %v343 = vld [vmem:[%s281 + $0xc0] sm:$0xf]
        %v344 = vld [vmem:[%s281 + $0xc4] sm:$0xf]
        %v345 = vld [vmem:[%s281 + $0xc8] sm:$0xf]
        %v346 = vld [vmem:[%s281 + $0xcc] sm:$0xf]
        %v347 = vld [vmem:[%s281 + $0xd0] sm:$0xf]
        %v348 = vld [vmem:[%s281 + $0xd4] sm:$0xf]
        %v349 = vld [vmem:[%s281 + $0xd8] sm:$0xf]
        %v350 = vld [vmem:[%s281 + $0xdc] sm:$0xf]
        %v351 = vld [vmem:[%s281 + $0xe0] sm:$0xf]
        %v352 = vld [vmem:[%s281 + $0xe4] sm:$0xf]
        %v353 = vld [vmem:[%s281 + $0xe8] sm:$0xf]
        %v354 = vld [vmem:[%s281 + $0xec] sm:$0xf]
        %v355 = vld [vmem:[%s281 + $0xf0] sm:$0xf]
        %v356 = vld [vmem:[%s281 + $0xf4] sm:$0xf]
        %v357 = vld [vmem:[%s281 + $0xf8] sm:$0xf]
        %v358 = vld [vmem:[%s281 + $0xfc] sm:$0xf]
        %v359 = vld [vmem:[%s232] sm:$0xf]
        %v360 = vld [vmem:[%s232 + $0x4] sm:$0xf]
        %v361 = vld [vmem:[%s232 + $0x8] sm:$0xf]
        %v362 = vld [vmem:[%s232 + $0xc] sm:$0xf]
        %v363 = vld [vmem:[%s241] sm:$0x1]
        %v365 = vperm.slane %v363, 0
        %v431 = vunpack.c.l.b16 %v295
        %v432 = vunpack.c.l.b16 %v296
        %v433 = vunpack.c.l.b16 %v297
        %v434 = vunpack.c.l.b16 %v298
        %v435 = vunpack.c.l.b16 %v299
        %v436 = vunpack.c.l.b16 %v300
        %v437 = vunpack.c.l.b16 %v301
        %v438 = vunpack.c.l.b16 %v302
        %v439 = vunpack.c.l.b16 %v303
        %v440 = vunpack.c.l.b16 %v304
        %v441 = vunpack.c.l.b16 %v305
        %v442 = vunpack.c.l.b16 %v306
        %v443 = vunpack.c.l.b16 %v307
        %v444 = vunpack.c.l.b16 %v308
        %v445 = vunpack.c.l.b16 %v309
        %v446 = vunpack.c.l.b16 %v310
        %v447 = vunpack.c.l.b16 %v311
        %v448 = vunpack.c.l.b16 %v312
        %v449 = vunpack.c.l.b16 %v313
        %v450 = vunpack.c.l.b16 %v314
        %v451 = vunpack.c.l.b16 %v315
        %v452 = vunpack.c.l.b16 %v316
        %v453 = vunpack.c.l.b16 %v317
        %v454 = vunpack.c.l.b16 %v318
        %v455 = vunpack.c.l.b16 %v319
        %v456 = vunpack.c.l.b16 %v320
        %v457 = vunpack.c.l.b16 %v321
        %v458 = vunpack.c.l.b16 %v322
        %v459 = vunpack.c.l.b16 %v323
        %v460 = vunpack.c.l.b16 %v324
        %v461 = vunpack.c.l.b16 %v325
        %v462 = vunpack.c.l.b16 %v326
        %v463 = vunpack.c.l.b16 %v327
        %v464 = vunpack.c.l.b16 %v328
        %v465 = vunpack.c.l.b16 %v329
        %v466 = vunpack.c.l.b16 %v330
        %v467 = vunpack.c.l.b16 %v331
        %v468 = vunpack.c.l.b16 %v332
        %v469 = vunpack.c.l.b16 %v333
        %v470 = vunpack.c.l.b16 %v334
        %v471 = vunpack.c.l.b16 %v335
        %v472 = vunpack.c.l.b16 %v336
        %v473 = vunpack.c.l.b16 %v337
        %v474 = vunpack.c.l.b16 %v338
        %v475 = vunpack.c.l.b16 %v339
        %v476 = vunpack.c.l.b16 %v340
        %v477 = vunpack.c.l.b16 %v341
        %v478 = vunpack.c.l.b16 %v342
        %v479 = vunpack.c.l.b16 %v343
        %v480 = vunpack.c.l.b16 %v344
        %v481 = vunpack.c.l.b16 %v345
        %v482 = vunpack.c.l.b16 %v346
        %v483 = vunpack.c.l.b16 %v347
        %v484 = vunpack.c.l.b16 %v348
        %v485 = vunpack.c.l.b16 %v349
        %v486 = vunpack.c.l.b16 %v350
        %v487 = vunpack.c.l.b16 %v351
        %v488 = vunpack.c.l.b16 %v352
        %v489 = vunpack.c.l.b16 %v353
        %v490 = vunpack.c.l.b16 %v354
        %v491 = vunpack.c.l.b16 %v355
        %v492 = vunpack.c.l.b16 %v356
        %v493 = vunpack.c.l.b16 %v357
        %v494 = vunpack.c.l.b16 %v358
        %v495 = vpack.c.b16 %v432, %v431
        %v496 = vpack.c.b16 %v434, %v433
        %v497 = vpack.c.b16 %v436, %v435
        %v498 = vpack.c.b16 %v438, %v437
        %v499 = vpack.c.b16 %v440, %v439
        %v500 = vpack.c.b16 %v442, %v441
        %v501 = vpack.c.b16 %v444, %v443
        %v502 = vpack.c.b16 %v446, %v445
        %v503 = vpack.c.b16 %v448, %v447
        %v504 = vpack.c.b16 %v450, %v449
        %v505 = vpack.c.b16 %v452, %v451
        %v506 = vpack.c.b16 %v454, %v453
        %v507 = vpack.c.b16 %v456, %v455
        %v508 = vpack.c.b16 %v458, %v457
        %v509 = vpack.c.b16 %v460, %v459
        %v510 = vpack.c.b16 %v462, %v461
        %v511 = vpack.c.b16 %v464, %v463
        %v512 = vpack.c.b16 %v466, %v465
        %v513 = vpack.c.b16 %v468, %v467
        %v514 = vpack.c.b16 %v470, %v469
        %v515 = vpack.c.b16 %v472, %v471
        %v516 = vpack.c.b16 %v474, %v473
        %v517 = vpack.c.b16 %v476, %v475
        %v518 = vpack.c.b16 %v478, %v477
        %v519 = vpack.c.b16 %v480, %v479
        %v520 = vpack.c.b16 %v482, %v481
        %v521 = vpack.c.b16 %v484, %v483
        %v522 = vpack.c.b16 %v486, %v485
        %v523 = vpack.c.b16 %v488, %v487
        %v524 = vpack.c.b16 %v490, %v489
        %v525 = vpack.c.b16 %v492, %v491
        %v526 = vpack.c.b16 %v494, %v493
        %v531 = vunpack.c.l.b16 %v359
        %v532 = vunpack.c.l.b16 %v360
        %v533 = vunpack.c.l.b16 %v361
        %v534 = vunpack.c.l.b16 %v362
        %v535 = vpack.c.b16 %v532, %v531
        %v536 = vpack.c.b16 %v534, %v533
        %vm539 = vcmask 261120
        %v541 = vsel %vm539, %v495, 0
        %v544 = vsel %vm539, %v496, 0
        %v547 = vsel %vm539, %v497, 0
        %v550 = vsel %vm539, %v498, 0
        %v553 = vsel %vm539, %v499, 0
        %v556 = vsel %vm539, %v500, 0
        %v559 = vsel %vm539, %v501, 0
        %v562 = vsel %vm539, %v502, 0
        %v565 = vsel %vm539, %v503, 0
        %v568 = vsel %vm539, %v504, 0
        %v571 = vsel %vm539, %v505, 0
        %v574 = vsel %vm539, %v506, 0
        %v577 = vsel %vm539, %v507, 0
        %v580 = vsel %vm539, %v508, 0
        %v583 = vsel %vm539, %v509, 0
        %v586 = vsel %vm539, %v510, 0
        %v589 = vsel %vm539, %v511, 0
        %v592 = vsel %vm539, %v512, 0
        %v595 = vsel %vm539, %v513, 0
        %v598 = vsel %vm539, %v514, 0
        %v601 = vsel %vm539, %v515, 0
        %v604 = vsel %vm539, %v516, 0
        %v607 = vsel %vm539, %v517, 0
        %v610 = vsel %vm539, %v518, 0
        %v613 = vsel %vm539, %v519, 0
        %v616 = vsel %vm539, %v520, 0
        %v619 = vsel %vm539, %v521, 0
        %v622 = vsel %vm539, %v522, 0
        %v625 = vsel %vm539, %v523, 0
        %v628 = vsel %vm539, %v524, 0
        %v631 = vsel %vm539, %v525, 0
        %v634 = vsel %vm539, %v526, 0
        %636 = vmatpush.bf16.msra.mxu0 0
        %637 = vmatpush.bf16.msra.mxu0 0
        %638 = vmatpush.bf16.msra.mxu0 0
        %639 = vmatpush.bf16.msra.mxu0 0
        %640 = vmatpush.bf16.msra.mxu0 0
        %641 = vmatpush.bf16.msra.mxu0 0
        %642 = vmatpush.bf16.msra.mxu0 %v536
        %643 = vmatpush.bf16.msra.mxu0 %v535
        %644 = vmatmul.bf16.gmra.mxu0 %v541
        %v645 = vpop.f32.mrf.mxu0
        %v646 = vadd.f32 %v365, %v645
        %v647 = vpop.f32.mrf.mxu0
        %v648 = vadd.f32 %v365, %v647
        %649 = vmatmul.bf16.gmra.mxu0 %v544
        %v650 = vpop.f32.mrf.mxu0
        %v651 = vadd.f32 %v365, %v650
        %v652 = vpop.f32.mrf.mxu0
        %v653 = vadd.f32 %v365, %v652
        %654 = vmatmul.bf16.gmra.mxu0 %v547
        %v655 = vpop.f32.mrf.mxu0
        %v656 = vadd.f32 %v365, %v655
        %v657 = vpop.f32.mrf.mxu0
        %v658 = vadd.f32 %v365, %v657
        %659 = vmatmul.bf16.gmra.mxu0 %v550
        %v660 = vpop.f32.mrf.mxu0
        %v661 = vadd.f32 %v365, %v660
        %v662 = vpop.f32.mrf.mxu0
        %v663 = vadd.f32 %v365, %v662
        %664 = vmatmul.bf16.gmra.mxu0 %v553
        %v665 = vpop.f32.mrf.mxu0
        %v666 = vadd.f32 %v365, %v665
        %v667 = vpop.f32.mrf.mxu0
        %v668 = vadd.f32 %v365, %v667
        %669 = vmatmul.bf16.gmra.mxu0 %v556
        %v670 = vpop.f32.mrf.mxu0
        %v671 = vadd.f32 %v365, %v670
        %v672 = vpop.f32.mrf.mxu0
        %v673 = vadd.f32 %v365, %v672
        %674 = vmatmul.bf16.gmra.mxu0 %v559
        %v675 = vpop.f32.mrf.mxu0
        %v676 = vadd.f32 %v365, %v675
        %v677 = vpop.f32.mrf.mxu0
        %v678 = vadd.f32 %v365, %v677
        %679 = vmatmul.bf16.gmra.mxu0 %v562
        %v680 = vpop.f32.mrf.mxu0
        %v681 = vadd.f32 %v365, %v680
        %v682 = vpop.f32.mrf.mxu0
        %v683 = vadd.f32 %v365, %v682
        %684 = vmatmul.bf16.gmra.mxu0 %v565
        %v685 = vpop.f32.mrf.mxu0
        %v686 = vadd.f32 %v365, %v685
        %v687 = vpop.f32.mrf.mxu0
        %v688 = vadd.f32 %v365, %v687
        %689 = vmatmul.bf16.gmra.mxu0 %v568
        %v690 = vpop.f32.mrf.mxu0
        %v691 = vadd.f32 %v365, %v690
        %v692 = vpop.f32.mrf.mxu0
        %v693 = vadd.f32 %v365, %v692
        %694 = vmatmul.bf16.gmra.mxu0 %v571
        %v695 = vpop.f32.mrf.mxu0
        %v696 = vadd.f32 %v365, %v695
        %v697 = vpop.f32.mrf.mxu0
        %v698 = vadd.f32 %v365, %v697
        %699 = vmatmul.bf16.gmra.mxu0 %v574
        %v700 = vpop.f32.mrf.mxu0
        %v701 = vadd.f32 %v365, %v700
        %v702 = vpop.f32.mrf.mxu0
        %v703 = vadd.f32 %v365, %v702
        %704 = vmatmul.bf16.gmra.mxu0 %v577
        %v705 = vpop.f32.mrf.mxu0
        %v706 = vadd.f32 %v365, %v705
        %v707 = vpop.f32.mrf.mxu0
        %v708 = vadd.f32 %v365, %v707
        %709 = vmatmul.bf16.gmra.mxu0 %v580
        %v710 = vpop.f32.mrf.mxu0
        %v711 = vadd.f32 %v365, %v710
        %v712 = vpop.f32.mrf.mxu0
        %v713 = vadd.f32 %v365, %v712
        %714 = vmatmul.bf16.gmra.mxu0 %v583
        %v715 = vpop.f32.mrf.mxu0
        %v716 = vadd.f32 %v365, %v715
        %v717 = vpop.f32.mrf.mxu0
        %v718 = vadd.f32 %v365, %v717
        %719 = vmatmul.bf16.gmra.mxu0 %v586
        %v720 = vpop.f32.mrf.mxu0
        %v721 = vadd.f32 %v365, %v720
        %v722 = vpop.f32.mrf.mxu0
        %v723 = vadd.f32 %v365, %v722
        %724 = vmatmul.bf16.gmra.mxu0 %v589
        %v725 = vpop.f32.mrf.mxu0
        %v726 = vadd.f32 %v365, %v725
        %v727 = vpop.f32.mrf.mxu0
        %v728 = vadd.f32 %v365, %v727
        %729 = vmatmul.bf16.gmra.mxu0 %v592
        %v730 = vpop.f32.mrf.mxu0
        %v731 = vadd.f32 %v365, %v730
        %v732 = vpop.f32.mrf.mxu0
        %v733 = vadd.f32 %v365, %v732
        %734 = vmatmul.bf16.gmra.mxu0 %v595
        %v735 = vpop.f32.mrf.mxu0
        %v736 = vadd.f32 %v365, %v735
        %v737 = vpop.f32.mrf.mxu0
        %v738 = vadd.f32 %v365, %v737
        %739 = vmatmul.bf16.gmra.mxu0 %v598
        %v740 = vpop.f32.mrf.mxu0
        %v741 = vadd.f32 %v365, %v740
        %v742 = vpop.f32.mrf.mxu0
        %v743 = vadd.f32 %v365, %v742
        %744 = vmatmul.bf16.gmra.mxu0 %v601
        %v745 = vpop.f32.mrf.mxu0
        %v746 = vadd.f32 %v365, %v745
        %v747 = vpop.f32.mrf.mxu0
        %v748 = vadd.f32 %v365, %v747
        %749 = vmatmul.bf16.gmra.mxu0 %v604
        %v750 = vpop.f32.mrf.mxu0
        %v751 = vadd.f32 %v365, %v750
        %v752 = vpop.f32.mrf.mxu0
        %v753 = vadd.f32 %v365, %v752
        %754 = vmatmul.bf16.gmra.mxu0 %v607
        %v755 = vpop.f32.mrf.mxu0
        %v756 = vadd.f32 %v365, %v755
        %v757 = vpop.f32.mrf.mxu0
        %v758 = vadd.f32 %v365, %v757
        %759 = vmatmul.bf16.gmra.mxu0 %v610
        %v760 = vpop.f32.mrf.mxu0
        %v761 = vadd.f32 %v365, %v760
        %v762 = vpop.f32.mrf.mxu0
        %v763 = vadd.f32 %v365, %v762
        %764 = vmatmul.bf16.gmra.mxu0 %v613
        %v765 = vpop.f32.mrf.mxu0
        %v766 = vadd.f32 %v365, %v765
        %v767 = vpop.f32.mrf.mxu0
        %v768 = vadd.f32 %v365, %v767
        %769 = vmatmul.bf16.gmra.mxu0 %v616
        %v770 = vpop.f32.mrf.mxu0
        %v771 = vadd.f32 %v365, %v770
        %v772 = vpop.f32.mrf.mxu0
        %v773 = vadd.f32 %v365, %v772
        %774 = vmatmul.bf16.gmra.mxu0 %v619
        %v775 = vpop.f32.mrf.mxu0
        %v776 = vadd.f32 %v365, %v775
        %v777 = vpop.f32.mrf.mxu0
        %v778 = vadd.f32 %v365, %v777
        %779 = vmatmul.bf16.gmra.mxu0 %v622
        %v780 = vpop.f32.mrf.mxu0
        %v781 = vadd.f32 %v365, %v780
        %v782 = vpop.f32.mrf.mxu0
        %v783 = vadd.f32 %v365, %v782
        %784 = vmatmul.bf16.gmra.mxu0 %v625
        %v785 = vpop.f32.mrf.mxu0
        %v786 = vadd.f32 %v365, %v785
        %v787 = vpop.f32.mrf.mxu0
        %v788 = vadd.f32 %v365, %v787
        %789 = vmatmul.bf16.gmra.mxu0 %v628
        %v790 = vpop.f32.mrf.mxu0
        %v791 = vadd.f32 %v365, %v790
        %v792 = vpop.f32.mrf.mxu0
        %v793 = vadd.f32 %v365, %v792
        %794 = vmatmul.bf16.gmra.mxu0 %v631
        %v795 = vpop.f32.mrf.mxu0
        %v796 = vadd.f32 %v365, %v795
        %v797 = vpop.f32.mrf.mxu0
        %v798 = vadd.f32 %v365, %v797
        %799 = vmatmul.bf16.gmra.mxu0 %v634
        %v800 = vpop.f32.mrf.mxu0
        %v801 = vadd.f32 %v365, %v800
        %v802 = vpop.f32.mrf.mxu0
        %v803 = vadd.f32 %v365, %v802
        %804 = vdwg.mxu0
        %805 = vst.msk [vmem:[%s292] sm:$0xff] %vm539, %v646
        %806 = vst.msk [vmem:[%s292 + $0x8] sm:$0xff] %vm539, %v648
        %807 = vst.msk [vmem:[%s292 + $0x10] sm:$0xff] %vm539, %v651
        %808 = vst.msk [vmem:[%s292 + $0x18] sm:$0xff] %vm539, %v653
        %809 = vst.msk [vmem:[%s292 + $0x20] sm:$0xff] %vm539, %v656
        %810 = vst.msk [vmem:[%s292 + $0x28] sm:$0xff] %vm539, %v658
        %811 = vst.msk [vmem:[%s292 + $0x30] sm:$0xff] %vm539, %v661
        %812 = vst.msk [vmem:[%s292 + $0x38] sm:$0xff] %vm539, %v663
        %813 = vst.msk [vmem:[%s292 + $0x40] sm:$0xff] %vm539, %v666
        %814 = vst.msk [vmem:[%s292 + $0x48] sm:$0xff] %vm539, %v668
        %815 = vst.msk [vmem:[%s292 + $0x50] sm:$0xff] %vm539, %v671
        %816 = vst.msk [vmem:[%s292 + $0x58] sm:$0xff] %vm539, %v673
        %817 = vst.msk [vmem:[%s292 + $0x60] sm:$0xff] %vm539, %v676
        %818 = vst.msk [vmem:[%s292 + $0x68] sm:$0xff] %vm539, %v678
        %819 = vst.msk [vmem:[%s292 + $0x70] sm:$0xff] %vm539, %v681
        %820 = vst.msk [vmem:[%s292 + $0x78] sm:$0xff] %vm539, %v683
        %821 = vst.msk [vmem:[%s292 + $0x80] sm:$0xff] %vm539, %v686
        %822 = vst.msk [vmem:[%s292 + $0x88] sm:$0xff] %vm539, %v688
        %823 = vst.msk [vmem:[%s292 + $0x90] sm:$0xff] %vm539, %v691
        %824 = vst.msk [vmem:[%s292 + $0x98] sm:$0xff] %vm539, %v693
        %825 = vst.msk [vmem:[%s292 + $0xa0] sm:$0xff] %vm539, %v696
        %826 = vst.msk [vmem:[%s292 + $0xa8] sm:$0xff] %vm539, %v698
        %827 = vst.msk [vmem:[%s292 + $0xb0] sm:$0xff] %vm539, %v701
        %828 = vst.msk [vmem:[%s292 + $0xb8] sm:$0xff] %vm539, %v703
        %829 = vst.msk [vmem:[%s292 + $0xc0] sm:$0xff] %vm539, %v706
        %830 = vst.msk [vmem:[%s292 + $0xc8] sm:$0xff] %vm539, %v708
        %831 = vst.msk [vmem:[%s292 + $0xd0] sm:$0xff] %vm539, %v711
        %832 = vst.msk [vmem:[%s292 + $0xd8] sm:$0xff] %vm539, %v713
        %833 = vst.msk [vmem:[%s292 + $0xe0] sm:$0xff] %vm539, %v716
        %834 = vst.msk [vmem:[%s292 + $0xe8] sm:$0xff] %vm539, %v718
        %835 = vst.msk [vmem:[%s292 + $0xf0] sm:$0xff] %vm539, %v721
        %836 = vst.msk [vmem:[%s292 + $0xf8] sm:$0xff] %vm539, %v723
        %837 = vst.msk [vmem:[%s292 + $0x100] sm:$0xff] %vm539, %v726
        %838 = vst.msk [vmem:[%s292 + $0x108] sm:$0xff] %vm539, %v728
        %839 = vst.msk [vmem:[%s292 + $0x110] sm:$0xff] %vm539, %v731
        %840 = vst.msk [vmem:[%s292 + $0x118] sm:$0xff] %vm539, %v733
        %841 = vst.msk [vmem:[%s292 + $0x120] sm:$0xff] %vm539, %v736
        %842 = vst.msk [vmem:[%s292 + $0x128] sm:$0xff] %vm539, %v738
        %843 = vst.msk [vmem:[%s292 + $0x130] sm:$0xff] %vm539, %v741
        %844 = vst.msk [vmem:[%s292 + $0x138] sm:$0xff] %vm539, %v743
        %845 = vst.msk [vmem:[%s292 + $0x140] sm:$0xff] %vm539, %v746
        %846 = vst.msk [vmem:[%s292 + $0x148] sm:$0xff] %vm539, %v748
        %847 = vst.msk [vmem:[%s292 + $0x150] sm:$0xff] %vm539, %v751
        %848 = vst.msk [vmem:[%s292 + $0x158] sm:$0xff] %vm539, %v753
        %849 = vst.msk [vmem:[%s292 + $0x160] sm:$0xff] %vm539, %v756
        %850 = vst.msk [vmem:[%s292 + $0x168] sm:$0xff] %vm539, %v758
        %851 = vst.msk [vmem:[%s292 + $0x170] sm:$0xff] %vm539, %v761
        %852 = vst.msk [vmem:[%s292 + $0x178] sm:$0xff] %vm539, %v763
        %853 = vst.msk [vmem:[%s292 + $0x180] sm:$0xff] %vm539, %v766
        %854 = vst.msk [vmem:[%s292 + $0x188] sm:$0xff] %vm539, %v768
        %855 = vst.msk [vmem:[%s292 + $0x190] sm:$0xff] %vm539, %v771
        %856 = vst.msk [vmem:[%s292 + $0x198] sm:$0xff] %vm539, %v773
        %857 = vst.msk [vmem:[%s292 + $0x1a0] sm:$0xff] %vm539, %v776
        %858 = vst.msk [vmem:[%s292 + $0x1a8] sm:$0xff] %vm539, %v778
        %859 = vst.msk [vmem:[%s292 + $0x1b0] sm:$0xff] %vm539, %v781
        %860 = vst.msk [vmem:[%s292 + $0x1b8] sm:$0xff] %vm539, %v783
        %861 = vst.msk [vmem:[%s292 + $0x1c0] sm:$0xff] %vm539, %v786
        %862 = vst.msk [vmem:[%s292 + $0x1c8] sm:$0xff] %vm539, %v788
        %863 = vst.msk [vmem:[%s292 + $0x1d0] sm:$0xff] %vm539, %v791
        %864 = vst.msk [vmem:[%s292 + $0x1d8] sm:$0xff] %vm539, %v793
        %865 = vst.msk [vmem:[%s292 + $0x1e0] sm:$0xff] %vm539, %v796
        %866 = vst.msk [vmem:[%s292 + $0x1e8] sm:$0xff] %vm539, %v798
        %867 = vst.msk [vmem:[%s292 + $0x1f0] sm:$0xff] %vm539, %v801
        %868 = vst.msk [vmem:[%s292 + $0x1f8] sm:$0xff] %vm539, %v803
        %s869 = smul.u32 64, %s33
        %p870 = scmp.lt.s32.totalorder %s869, 575
        %s871 = scalar_select %p870, %s869, 575
        %p872 = scmp.lt.s32.totalorder %s34, 0
        %s873 = scalar_select %p872, %s34, 0
        %s874 = sadd.s32 %s873, %s871
        %s875 = smul.addr %s874, 8
        %s876 = scalar_lea.vmem %s4, %s875
        // Predicated region
        $region41: #{tpu_custom_call.1} parent=31 // pred_check
          %p877 = pneg %p147
        $region42: #{tpu_custom_call.1} parent=31 // pred_check_branch
          %879 = sbr.rel (%p877) target = $region44
        $region43: #{tpu_custom_call.1} parent=31 // pred_region
          %s880 = smul.u32 64, %s33
        $region44: #{tpu_custom_call.1} parent=31 // pred_fallthru
          _
      $region32: #{tpu_custom_call.1} parent=5 // pred_fallthru
        _
      %p881 = scmp.le.s32.totalorder 2, %s24
      // Predicated region
      $region45: #{tpu_custom_call.1} parent=5 // pred_check
        %p882 = pneg %p881
      $region46: #{tpu_custom_call.1} parent=5 // pred_check_branch
        %884 = sbr.rel (%p882) target = $region48
      $region47: #{tpu_custom_call.1} parent=5 // pred_region
        %s885 = ssub.s32 %s24, 2
        // Predicated region
        $region49: #{tpu_custom_call.1} parent=47 // pred_check
          %p886 = pneg %p153
        $region50: #{tpu_custom_call.1} parent=47 // pred_check_branch
          %888 = sbr.rel (%p886) target = $region52
        $region51: #{tpu_custom_call.1} parent=47 // pred_region
          %s889 = smul.u32 64, %s35
          %p890 = scmp.lt.s32.totalorder %s889, 575
          %s891 = scalar_select %p890, %s889, 575
          %p892 = scmp.lt.s32.totalorder %s36, 0
          %s893 = scalar_select %p892, %s36, 0
          %s894 = sadd.s32 %s893, %s891
          %s895 = smul.addr %s894, 8
          %s896 = scalar_lea.vmem %s4, %s895
        $region52: #{tpu_custom_call.1} parent=47 // pred_fallthru
          _
      $region48: #{tpu_custom_call.1} parent=5 // pred_fallthru
        _
    $region6: #{tpu_custom_call.1} parent=1 // loop_footer
      %s28 = sadd.s32 1, %s24
    $region7: #{tpu_custom_call.1} parent=1 // loop_footer_branch
      %23 = sbr.rel target = $region3
    $region8: #{tpu_custom_call.1} parent=1 // loop_exit
      _
    %897 = vsyncpa [#allocation5], 1
    %s898 = scalar_lea.sflag [#allocation5], 1
    %899 = vsyncpa %s898, 1
    %900 = vsyncpa [#allocation7], 1
    %s901 = scalar_lea.sflag [#allocation7], 1
    %902 = vsyncpa %s901, 1

</llo_original>
